<compile_context>
chip_gen: v7x
topology: tpu7x:2x2x1
jax: 0.10.0
libtpu: 0.0.40
codegen_flags: <defaults>
</compile_context>

<pallas_src>
import functools
import math

import jax
import jax.numpy as jnp
from jax.experimental import pallas as pl
from jax.experimental.pallas import tpu as pltpu


def _round_up(v, m):
    return (v + m - 1) // m * m


def _apply_act(y, act):
    if act == "tanh":
        return jnp.tanh(y)
    if act == "relu":
        return jnp.maximum(y, 0.0)
    if act == "leaky_relu":
        return jnp.where(y >= 0.0, y, 0.01 * y)
    if act == "gelu":
        return jax.nn.gelu(y, approximate=False)   # PyTorch F.gelu = exact erf form
    if act == "sigmoid":
        return jax.nn.sigmoid(y)
    if act == "sin":
        return jnp.sin(y)
    return y                                        # "none" (last layer)


# -----------------------------------------------------------------------------
# Fused Pallas kernel: whole FNN_LN forward for one (TM, d_in_padded) batch tile.
# Layer loop statically unrolled; per-layer padded params stay resident in VMEM.
# -----------------------------------------------------------------------------
def _fused_mlp_kernel(*refs, dims, ln_layers, act, eps=1e-5):
    n_lin = len(dims) - 1
    n_ln = len(ln_layers)
    x_ref = refs[0]
    w_refs = refs[1:1 + n_lin]
    b_refs = refs[1 + n_lin:1 + 2 * n_lin]
    g_refs = refs[1 + 2 * n_lin:1 + 2 * n_lin + n_ln]
    bt_refs = refs[1 + 2 * n_lin + n_ln:1 + 2 * n_lin + 2 * n_ln]
    o_ref = refs[1 + 2 * n_lin + 2 * n_ln]

    h = x_ref[...].astype(jnp.float32)              # (TM, dims_p[0]); pads are 0
    ln_idx = 0
    for li in range(n_lin):
        d_in = dims[li]
        d_out = dims[li + 1]
        dp_out = w_refs[li].shape[-1]

        if li in ln_layers:
            # Single-pass LayerNorm over the real width d_in.  Padded lanes of h
            # are exactly zero, so unmasked sums equal sums over d_in.
            inv_d = 1.0 / d_in
            mean = jnp.sum(h, axis=-1, keepdims=True) * inv_d
            msq = jnp.sum(h * h, axis=-1, keepdims=True) * inv_d
            var = msq - mean * mean
            inv = jax.lax.rsqrt(var + eps)
            # gamma/beta are zero on padded lanes -> normalized pads stay zero.
            h = (h - mean) * (inv * g_refs[ln_idx][...]) + bt_refs[ln_idx][...]
            ln_idx += 1

        # Linear on the MXU (bf16 or f32 operands, f32 accumulation).
        y = jnp.dot(h.astype(w_refs[li].dtype), w_refs[li][...],
                    preferred_element_type=jnp.float32)
        y = y + b_refs[li][...]                     # (1, dp_out) resident bias

        if li < n_lin - 1:
            y = _apply_act(y, act)
            if act == "sigmoid" and d_out < dp_out:
                # sigmoid(0) != 0 -> re-zero padded lanes so the next LayerNorm
                # sums stay exact.  All other supported acts map 0 -> 0.
                lane = jax.lax.broadcasted_iota(jnp.int32, (1, dp_out), 1)
                y = jnp.where(lane < d_out, y, 0.0)
        h = y

    o_ref[...] = h.astype(o_ref.dtype)


# -----------------------------------------------------------------------------
# One-time parameter packing (hoisted out of the per-call path).
# -----------------------------------------------------------------------------
def pack_params(params, *, matmul_dtype=jnp.bfloat16):
    """Pad each layer to its own 128-lane-rounded width and cast weights to the
    matmul operand dtype.  Padded rows/cols of W and padded bias/gamma/beta
    entries are zero, so padded activation lanes stay exactly zero end to end."""
    dims = tuple([params[0]["w"].shape[0]] + [p["w"].shape[1] for p in params])
    dims_p = tuple(_round_up(d, 128) for d in dims)
    ws, bs, gs, bts = [], [], [], []
    for i, p in enumerate(params):
        w = jnp.zeros((dims_p[i], dims_p[i + 1]), jnp.float32)
        w = w.at[:dims[i], :dims[i + 1]].set(p["w"]).astype(matmul_dtype)
        b = jnp.zeros((1, dims_p[i + 1]), jnp.float32)
        b = b.at[0, :dims[i + 1]].set(p["b"].reshape(-1))
        ws.append(w)
        bs.append(b)
        if "gamma" in p:
            g = jnp.zeros((1, dims_p[i]), jnp.float32)
            g = g.at[0, :dims[i]].set(p["gamma"].reshape(-1))
            bt = jnp.zeros((1, dims_p[i]), jnp.float32)
            bt = bt.at[0, :dims[i]].set(p["beta"].reshape(-1))
            gs.append(g)
            bts.append(bt)
    return {"dims": dims, "dims_p": dims_p,
            "ws": tuple(ws), "bs": tuple(bs),
            "gammas": tuple(gs), "betas": tuple(bts)}


# -----------------------------------------------------------------------------
# Wrapper: tile the batch and invoke the single fused pallas_call.
# -----------------------------------------------------------------------------
def fnn_ln_forward(x, packed, activation_str="tanh", *, block_rows=512):
    dims, dims_p = packed["dims"], packed["dims_p"]
    ws, bs, gs, bts = packed["ws"], packed["bs"], packed["gammas"], packed["betas"]
    n_lin = len(dims) - 1
    ln_layers = tuple(range(1, n_lin - 1))          # LN on the input of linears 1..L-2
    assert len(gs) == len(ln_layers)

    # Batch tiling: multiple-of-8 rows per tile; aim for >= 2 grid steps when the
    # batch allows it so the "parallel" axis shards across v7x's 2 TensorCores.
    n = x.shape[0]
    n8 = _round_up(n, 8)
    tm = min(_round_up(block_rows, 8), max(8, _round_up((n8 + 1) // 2, 8)))
    n_pad = _round_up(n8, tm)

    # Narrow HBM-facing input slab: only the first layer's own padded width.
    x_pad = jnp.zeros((n_pad, dims_p[0]), jnp.float32)
    x_pad = x_pad.at[:n, :dims[0]].set(x.astype(jnp.float32))

    kernel = functools.partial(
        _fused_mlp_kernel, dims=dims, ln_layers=ln_layers, act=activation_str)

    const2d = lambda i: (0, 0)                      # resident params, DMA'd once
    in_specs = [pl.BlockSpec((tm, dims_p[0]), lambda i: (i, 0))]
    in_specs += [pl.BlockSpec(w.shape, const2d) for w in ws]
    in_specs += [pl.BlockSpec(b.shape, const2d) for b in bs]
    in_specs += [pl.BlockSpec(g.shape, const2d) for g in gs]
    in_specs += [pl.BlockSpec(bt.shape, const2d) for bt in bts]

    # VMEM budget from the actual footprint: resident params (assume the compiler
    # double-buffers them to be safe) + double-buffered IO tiles + live
    # activations.  Clamp to [32, 64] MiB so the limit is also valid on v7x.
    param_bytes = sum(int(a.size) * a.dtype.itemsize for a in (ws + bs + gs + bts))
    act_bytes = 4 * tm * (2 * dims_p[0] + 2 * dims_p[-1] + 3 * max(dims_p))
    vmem_limit = int(min(64 << 20, max(32 << 20, 2 * (2 * param_bytes + act_bytes))))
    # TODO(synk): for very wide nets on v7x, switch resident param specs to
    # pipeline_mode=pl.Buffered(1) or stream weights per layer.

    out = pl.pallas_call(
        kernel,
        out_shape=jax.ShapeDtypeStruct((n_pad, dims_p[-1]), jnp.float32),
        grid=(n_pad // tm,),
        in_specs=in_specs,
        out_specs=pl.BlockSpec((tm, dims_p[-1]), lambda i: (i, 0)),
        compiler_params=pltpu.CompilerParams(
            dimension_semantics=("parallel",),
            vmem_limit_bytes=vmem_limit),
    )(x_pad, *ws, *bs, *gs, *bts)

    return out[:n, :dims[-1]]


# -----------------------------------------------------------------------------
# Parameter construction (xavier_uniform with tanh gain, zero biases;
# LayerNorm affine initialized to 1 / 0 — mirrors param_initialization).
# -----------------------------------------------------------------------------
def init_params(layers, key):
    params = []
    n_lin = len(layers) - 1
    gain = 5.0 / 3.0  # nn.init.calculate_gain('tanh')
    for i in range(n_lin):
        key, sub = jax.random.split(key)
        fan_in, fan_out = layers[i], layers[i + 1]
        bound = gain * math.sqrt(6.0 / (fan_in + fan_out))
        w = jax.random.uniform(sub, (fan_in, fan_out), jnp.float32,
                               minval=-bound, maxval=bound)
        b = jnp.zeros((1, fan_out), jnp.float32)
        p = {"w": w, "b": b}
        if 1 <= i <= len(layers) - 3:   # LN on the INPUT of linear i
            p["gamma"] = jnp.ones((1, fan_in), jnp.float32)
            p["beta"] = jnp.zeros((1, fan_in), jnp.float32)
        params.append(p)
    return params


# -----------------------------------------------------------------------------
# Pure-JAX reference (for correctness check) — full-precision matmuls.
# -----------------------------------------------------------------------------
def fnn_ln_reference(x, params, activation_str="tanh"):
    n_lin = len(params)
    h = x
    for i, p in enumerate(params):
        is_last = (i == n_lin - 1)
        if (not is_last) and (i >= 1):
            mean = jnp.mean(h, axis=-1, keepdims=True)
            var = jnp.mean((h - mean) ** 2, axis=-1, keepdims=True)
            h = (h - mean) / jnp.sqrt(var + 1e-5)
            h = h * p["gamma"] + p["beta"]
        h = jnp.dot(h, p["w"], precision=jax.lax.Precision.HIGHEST) + p["b"]
        if not is_last:
            h = _apply_act(h, activation_str)
    return h


if __name__ == "__main__":
    # layers = [in, hidden, hidden, hidden, out] as in the DeepONet config.
    layers = [16, 32, 32, 32, 8]
    activation_str = "tanh"

    key = jax.random.PRNGKey(0)
    key, xkey, xkey2 = jax.random.split(key, 3)
    params = init_params(layers, key)

    # Pack parameters ONCE (hoisted out of the per-call path).
    packed_bf16 = pack_params(params, matmul_dtype=jnp.bfloat16)  # fast default path
    packed_f32 = pack_params(params, matmul_dtype=jnp.float32)    # bit-accurate mode

    fwd_bf16 = jax.jit(lambda xx: fnn_ln_forward(xx, packed_bf16, activation_str))
    fwd_f32 = jax.jit(lambda xx: fnn_ln_forward(xx, packed_f32, activation_str))

    # Small batch (single grid step).
    x_small = jax.random.normal(xkey, (8, layers[0]), jnp.float32)
    ref_s = fnn_ln_reference(x_small, params, activation_str)
    out_s_bf16 = jax.block_until_ready(fwd_bf16(x_small))
    out_s_f32 = jax.block_until_ready(fwd_f32(x_small))
    assert out_s_bf16.shape == (8, layers[-1])
    assert jnp.allclose(out_s_f32, ref_s, atol=5e-4, rtol=5e-4)
    assert jnp.allclose(out_s_bf16, ref_s, atol=5e-2, rtol=5e-2)

    # Batch that exercises row padding + a multi-step "parallel" grid.
    x_big = jax.random.normal(xkey2, (300, layers[0]), jnp.float32)
    ref_b = fnn_ln_reference(x_big, params, activation_str)
    out_b_bf16 = jax.block_until_ready(fwd_bf16(x_big))
    out_b_f32 = jax.block_until_ready(fwd_f32(x_big))
    assert out_b_bf16.shape == (300, layers[-1])
    assert jnp.allclose(out_b_f32, ref_b, atol=5e-4, rtol=5e-4)
    assert jnp.allclose(out_b_bf16, ref_b, atol=5e-2, rtol=5e-2)

    print("KERNEL_OK")
</pallas_src>

<mosaic_0001>
module attributes {stable_mosaic.version = 11 : i64} {
  func.func @_fused_mlp_kernel(%arg0: i32, %arg1: memref<8x128xf32, #tpu.memory_space<vmem>>, %arg2: memref<128x128xbf16, #tpu.memory_space<vmem>>, %arg3: memref<128x128xbf16, #tpu.memory_space<vmem>>, %arg4: memref<128x128xbf16, #tpu.memory_space<vmem>>, %arg5: memref<128x128xbf16, #tpu.memory_space<vmem>>, %arg6: memref<1x128xf32, #tpu.memory_space<vmem>>, %arg7: memref<1x128xf32, #tpu.memory_space<vmem>>, %arg8: memref<1x128xf32, #tpu.memory_space<vmem>>, %arg9: memref<1x128xf32, #tpu.memory_space<vmem>>, %arg10: memref<1x128xf32, #tpu.memory_space<vmem>>, %arg11: memref<1x128xf32, #tpu.memory_space<vmem>>, %arg12: memref<1x128xf32, #tpu.memory_space<vmem>>, %arg13: memref<1x128xf32, #tpu.memory_space<vmem>>, %arg14: memref<8x128xf32, #tpu.memory_space<vmem>>) attributes {dimension_semantics = [#tpu.dimension_semantics<parallel>], iteration_bounds = array<i64: 1>, scalar_prefetch = 0 : i64, scratch_operands = 0 : i64, tpu.core_type = #tpu.core_type<tc>, window_params = [{transform_indices = @transform_0, window_bounds = array<i64: 8, 128>}, {pipeline_mode = #tpu.pipeline_mode<synchronous>, transform_indices = @transform_1, window_bounds = array<i64: 128, 128>}, {pipeline_mode = #tpu.pipeline_mode<synchronous>, transform_indices = @transform_2, window_bounds = array<i64: 128, 128>}, {pipeline_mode = #tpu.pipeline_mode<synchronous>, transform_indices = @transform_3, window_bounds = array<i64: 128, 128>}, {pipeline_mode = #tpu.pipeline_mode<synchronous>, transform_indices = @transform_4, window_bounds = array<i64: 128, 128>}, {pipeline_mode = #tpu.pipeline_mode<synchronous>, transform_indices = @transform_5, window_bounds = array<i64: 1, 128>}, {pipeline_mode = #tpu.pipeline_mode<synchronous>, transform_indices = @transform_6, window_bounds = array<i64: 1, 128>}, {pipeline_mode = #tpu.pipeline_mode<synchronous>, transform_indices = @transform_7, window_bounds = array<i64: 1, 128>}, {pipeline_mode = #tpu.pipeline_mode<synchronous>, transform_indices = @transform_8, window_bounds = array<i64: 1, 128>}, {pipeline_mode = #tpu.pipeline_mode<synchronous>, transform_indices = @transform_9, window_bounds = array<i64: 1, 128>}, {pipeline_mode = #tpu.pipeline_mode<synchronous>, transform_indices = @transform_10, window_bounds = array<i64: 1, 128>}, {pipeline_mode = #tpu.pipeline_mode<synchronous>, transform_indices = @transform_11, window_bounds = array<i64: 1, 128>}, {pipeline_mode = #tpu.pipeline_mode<synchronous>, transform_indices = @transform_12, window_bounds = array<i64: 1, 128>}, {transform_indices = @transform_13, window_bounds = array<i64: 8, 128>}]} {
    %c0 = arith.constant 0 : index
    %c0_0 = arith.constant 0 : index
    %0 = vector.load %arg1[%c0, %c0_0] : memref<8x128xf32, #tpu.memory_space<vmem>>, vector<8x128xf32>
    %1 = arith.truncf %0 : vector<8x128xf32> to vector<8x128xbf16>
    %c0_1 = arith.constant 0 : index
    %c0_2 = arith.constant 0 : index
    %2 = vector.load %arg2[%c0_1, %c0_2] : memref<128x128xbf16, #tpu.memory_space<vmem>>, vector<128x128xbf16>
    %cst = arith.constant dense<0.000000e+00> : vector<8x128xf32>
    %3 = tpu.matmul %1, %2, %cst {dimension_numbers = #tpu.dot_dimension_numbers<[1], [0], [0], [1], [0, 0, 1, 1], [], []>} : vector<8x128xbf16>, vector<128x128xbf16>, vector<8x128xf32> -> vector<8x128xf32>
    %c0_3 = arith.constant 0 : index
    %c0_4 = arith.constant 0 : index
    %4 = vector.load %arg6[%c0_3, %c0_4] : memref<1x128xf32, #tpu.memory_space<vmem>>, vector<1x128xf32>
    %5 = vector.broadcast %4 : vector<1x128xf32> to vector<8x128xf32>
    %6 = arith.addf %3, %5 : vector<8x128xf32>
    %7 = math.tanh %6 : vector<8x128xf32>
    %cst_5 = arith.constant dense<0.000000e+00> : vector<8xf32>
    %8 = vector.multi_reduction <add>, %7, %cst_5 [1] : vector<8x128xf32> to vector<8xf32>
    %9 = vector.shape_cast %8 : vector<8xf32> to vector<8x1xf32>
    %cst_6 = arith.constant 3.125000e-02 : f32
    %10 = vector.broadcast %cst_6 : f32 to vector<8x1xf32>
    %11 = arith.mulf %9, %10 : vector<8x1xf32>
    %12 = arith.mulf %7, %7 : vector<8x128xf32>
    %cst_7 = arith.constant dense<0.000000e+00> : vector<8xf32>
    %13 = vector.multi_reduction <add>, %12, %cst_7 [1] : vector<8x128xf32> to vector<8xf32>
    %14 = vector.shape_cast %13 : vector<8xf32> to vector<8x1xf32>
    %cst_8 = arith.constant 3.125000e-02 : f32
    %15 = vector.broadcast %cst_8 : f32 to vector<8x1xf32>
    %16 = arith.mulf %14, %15 : vector<8x1xf32>
    %17 = arith.mulf %11, %11 : vector<8x1xf32>
    %18 = arith.subf %16, %17 : vector<8x1xf32>
    %cst_9 = arith.constant 9.99999974E-6 : f32
    %19 = vector.broadcast %cst_9 : f32 to vector<8x1xf32>
    %20 = arith.addf %18, %19 : vector<8x1xf32>
    %21 = math.rsqrt %20 : vector<8x1xf32>
    %22 = vector.broadcast %11 : vector<8x1xf32> to vector<8x128xf32>
    %23 = arith.subf %7, %22 : vector<8x128xf32>
    %c0_10 = arith.constant 0 : index
    %c0_11 = arith.constant 0 : index
    %24 = vector.load %arg10[%c0_10, %c0_11] : memref<1x128xf32, #tpu.memory_space<vmem>>, vector<1x128xf32>
    %25 = vector.broadcast %21 : vector<8x1xf32> to vector<8x128xf32>
    %26 = vector.broadcast %24 : vector<1x128xf32> to vector<8x128xf32>
    %27 = arith.mulf %25, %26 : vector<8x128xf32>
    %28 = arith.mulf %23, %27 : vector<8x128xf32>
    %c0_12 = arith.constant 0 : index
    %c0_13 = arith.constant 0 : index
    %29 = vector.load %arg12[%c0_12, %c0_13] : memref<1x128xf32, #tpu.memory_space<vmem>>, vector<1x128xf32>
    %30 = vector.broadcast %29 : vector<1x128xf32> to vector<8x128xf32>
    %31 = arith.addf %28, %30 : vector<8x128xf32>
    %32 = arith.truncf %31 : vector<8x128xf32> to vector<8x128xbf16>
    %c0_14 = arith.constant 0 : index
    %c0_15 = arith.constant 0 : index
    %33 = vector.load %arg3[%c0_14, %c0_15] : memref<128x128xbf16, #tpu.memory_space<vmem>>, vector<128x128xbf16>
    %cst_16 = arith.constant dense<0.000000e+00> : vector<8x128xf32>
    %34 = tpu.matmul %32, %33, %cst_16 {dimension_numbers = #tpu.dot_dimension_numbers<[1], [0], [0], [1], [0, 0, 1, 1], [], []>} : vector<8x128xbf16>, vector<128x128xbf16>, vector<8x128xf32> -> vector<8x128xf32>
    %c0_17 = arith.constant 0 : index
    %c0_18 = arith.constant 0 : index
    %35 = vector.load %arg7[%c0_17, %c0_18] : memref<1x128xf32, #tpu.memory_space<vmem>>, vector<1x128xf32>
    %36 = vector.broadcast %35 : vector<1x128xf32> to vector<8x128xf32>
    %37 = arith.addf %34, %36 : vector<8x128xf32>
    %38 = math.tanh %37 : vector<8x128xf32>
    %cst_19 = arith.constant dense<0.000000e+00> : vector<8xf32>
    %39 = vector.multi_reduction <add>, %38, %cst_19 [1] : vector<8x128xf32> to vector<8xf32>
    %40 = vector.shape_cast %39 : vector<8xf32> to vector<8x1xf32>
    %cst_20 = arith.constant 3.125000e-02 : f32
    %41 = vector.broadcast %cst_20 : f32 to vector<8x1xf32>
    %42 = arith.mulf %40, %41 : vector<8x1xf32>
    %43 = arith.mulf %38, %38 : vector<8x128xf32>
    %cst_21 = arith.constant dense<0.000000e+00> : vector<8xf32>
    %44 = vector.multi_reduction <add>, %43, %cst_21 [1] : vector<8x128xf32> to vector<8xf32>
    %45 = vector.shape_cast %44 : vector<8xf32> to vector<8x1xf32>
    %cst_22 = arith.constant 3.125000e-02 : f32
    %46 = vector.broadcast %cst_22 : f32 to vector<8x1xf32>
    %47 = arith.mulf %45, %46 : vector<8x1xf32>
    %48 = arith.mulf %42, %42 : vector<8x1xf32>
    %49 = arith.subf %47, %48 : vector<8x1xf32>
    %cst_23 = arith.constant 9.99999974E-6 : f32
    %50 = vector.broadcast %cst_23 : f32 to vector<8x1xf32>
    %51 = arith.addf %49, %50 : vector<8x1xf32>
    %52 = math.rsqrt %51 : vector<8x1xf32>
    %53 = vector.broadcast %42 : vector<8x1xf32> to vector<8x128xf32>
    %54 = arith.subf %38, %53 : vector<8x128xf32>
    %c0_24 = arith.constant 0 : index
    %c0_25 = arith.constant 0 : index
    %55 = vector.load %arg11[%c0_24, %c0_25] : memref<1x128xf32, #tpu.memory_space<vmem>>, vector<1x128xf32>
    %56 = vector.broadcast %52 : vector<8x1xf32> to vector<8x128xf32>
    %57 = vector.broadcast %55 : vector<1x128xf32> to vector<8x128xf32>
    %58 = arith.mulf %56, %57 : vector<8x128xf32>
    %59 = arith.mulf %54, %58 : vector<8x128xf32>
    %c0_26 = arith.constant 0 : index
    %c0_27 = arith.constant 0 : index
    %60 = vector.load %arg13[%c0_26, %c0_27] : memref<1x128xf32, #tpu.memory_space<vmem>>, vector<1x128xf32>
    %61 = vector.broadcast %60 : vector<1x128xf32> to vector<8x128xf32>
    %62 = arith.addf %59, %61 : vector<8x128xf32>
    %63 = arith.truncf %62 : vector<8x128xf32> to vector<8x128xbf16>
    %c0_28 = arith.constant 0 : index
    %c0_29 = arith.constant 0 : index
    %64 = vector.load %arg4[%c0_28, %c0_29] : memref<128x128xbf16, #tpu.memory_space<vmem>>, vector<128x128xbf16>
    %cst_30 = arith.constant dense<0.000000e+00> : vector<8x128xf32>
    %65 = tpu.matmul %63, %64, %cst_30 {dimension_numbers = #tpu.dot_dimension_numbers<[1], [0], [0], [1], [0, 0, 1, 1], [], []>} : vector<8x128xbf16>, vector<128x128xbf16>, vector<8x128xf32> -> vector<8x128xf32>
    %c0_31 = arith.constant 0 : index
    %c0_32 = arith.constant 0 : index
    %66 = vector.load %arg8[%c0_31, %c0_32] : memref<1x128xf32, #tpu.memory_space<vmem>>, vector<1x128xf32>
    %67 = vector.broadcast %66 : vector<1x128xf32> to vector<8x128xf32>
    %68 = arith.addf %65, %67 : vector<8x128xf32>
    %69 = math.tanh %68 : vector<8x128xf32>
    %70 = arith.truncf %69 : vector<8x128xf32> to vector<8x128xbf16>
    %c0_33 = arith.constant 0 : index
    %c0_34 = arith.constant 0 : index
    %71 = vector.load %arg5[%c0_33, %c0_34] : memref<128x128xbf16, #tpu.memory_space<vmem>>, vector<128x128xbf16>
    %cst_35 = arith.constant dense<0.000000e+00> : vector<8x128xf32>
    %72 = tpu.matmul %70, %71, %cst_35 {dimension_numbers = #tpu.dot_dimension_numbers<[1], [0], [0], [1], [0, 0, 1, 1], [], []>} : vector<8x128xbf16>, vector<128x128xbf16>, vector<8x128xf32> -> vector<8x128xf32>
    %c0_36 = arith.constant 0 : index
    %c0_37 = arith.constant 0 : index
    %73 = vector.load %arg9[%c0_36, %c0_37] : memref<1x128xf32, #tpu.memory_space<vmem>>, vector<1x128xf32>
    %74 = vector.broadcast %73 : vector<1x128xf32> to vector<8x128xf32>
    %75 = arith.addf %72, %74 : vector<8x128xf32>
    %c0_38 = arith.constant 0 : index
    %c0_39 = arith.constant 0 : index
    %76 = vector.load %arg14[%c0_38, %c0_39] : memref<8x128xf32, #tpu.memory_space<vmem>>, vector<8x128xf32>
    tpu.vector_store %arg14[%c0_38, %c0_39], %75 {strides = array<i32>} : memref<8x128xf32, #tpu.memory_space<vmem>>, vector<8x128xf32>,
    return
  }
  func.func @transform_0(%arg0: i32) -> (i32, i32) {
    %c0_i32 = arith.constant 0 : i32
    %c0_i32_0 = arith.constant 0 : i32
    return %arg0, %c0_i32 : i32, i32
  }
  func.func @transform_1(%arg0: i32) -> (i32, i32) {
    %c0_i32 = arith.constant 0 : i32
    %c0_i32_0 = arith.constant 0 : i32
    %c0_i32_1 = arith.constant 0 : i32
    return %c0_i32, %c0_i32_0 : i32, i32
  }
  func.func @transform_2(%arg0: i32) -> (i32, i32) {
    %c0_i32 = arith.constant 0 : i32
    %c0_i32_0 = arith.constant 0 : i32
    %c0_i32_1 = arith.constant 0 : i32
    return %c0_i32, %c0_i32_0 : i32, i32
  }
  func.func @transform_3(%arg0: i32) -> (i32, i32) {
    %c0_i32 = arith.constant 0 : i32
    %c0_i32_0 = arith.constant 0 : i32
    %c0_i32_1 = arith.constant 0 : i32
    return %c0_i32, %c0_i32_0 : i32, i32
  }
  func.func @transform_4(%arg0: i32) -> (i32, i32) {
    %c0_i32 = arith.constant 0 : i32
    %c0_i32_0 = arith.constant 0 : i32
    %c0_i32_1 = arith.constant 0 : i32
    return %c0_i32, %c0_i32_0 : i32, i32
  }
  func.func @transform_5(%arg0: i32) -> (i32, i32) {
    %c0_i32 = arith.constant 0 : i32
    %c0_i32_0 = arith.constant 0 : i32
    %c0_i32_1 = arith.constant 0 : i32
    return %c0_i32, %c0_i32_0 : i32, i32
  }
  func.func @transform_6(%arg0: i32) -> (i32, i32) {
    %c0_i32 = arith.constant 0 : i32
    %c0_i32_0 = arith.constant 0 : i32
    %c0_i32_1 = arith.constant 0 : i32
    return %c0_i32, %c0_i32_0 : i32, i32
  }
  func.func @transform_7(%arg0: i32) -> (i32, i32) {
    %c0_i32 = arith.constant 0 : i32
    %c0_i32_0 = arith.constant 0 : i32
    %c0_i32_1 = arith.constant 0 : i32
    return %c0_i32, %c0_i32_0 : i32, i32
  }
  func.func @transform_8(%arg0: i32) -> (i32, i32) {
    %c0_i32 = arith.constant 0 : i32
    %c0_i32_0 = arith.constant 0 : i32
    %c0_i32_1 = arith.constant 0 : i32
    return %c0_i32, %c0_i32_0 : i32, i32
  }
  func.func @transform_9(%arg0: i32) -> (i32, i32) {
    %c0_i32 = arith.constant 0 : i32
    %c0_i32_0 = arith.constant 0 : i32
    %c0_i32_1 = arith.constant 0 : i32
    return %c0_i32, %c0_i32_0 : i32, i32
  }
  func.func @transform_10(%arg0: i32) -> (i32, i32) {
    %c0_i32 = arith.constant 0 : i32
    %c0_i32_0 = arith.constant 0 : i32
    %c0_i32_1 = arith.constant 0 : i32
    return %c0_i32, %c0_i32_0 : i32, i32
  }
  func.func @transform_11(%arg0: i32) -> (i32, i32) {
    %c0_i32 = arith.constant 0 : i32
    %c0_i32_0 = arith.constant 0 : i32
    %c0_i32_1 = arith.constant 0 : i32
    return %c0_i32, %c0_i32_0 : i32, i32
  }
  func.func @transform_12(%arg0: i32) -> (i32, i32) {
    %c0_i32 = arith.constant 0 : i32
    %c0_i32_0 = arith.constant 0 : i32
    %c0_i32_1 = arith.constant 0 : i32
    return %c0_i32, %c0_i32_0 : i32, i32
  }
  func.func @transform_13(%arg0: i32) -> (i32, i32) {
    %c0_i32 = arith.constant 0 : i32
    %c0_i32_0 = arith.constant 0 : i32
    return %arg0, %c0_i32 : i32, i32
  }
}

</mosaic_0001>

<llo_original>
// kernel: _lambda_.1
$region0: #{_lambda_.1}
  #allocation0 [shape = 'u32[]', space=smem, size = 0x4, offset = 0x4, fixed_abs, tag = 'smem constant byte address 0x4 - core index']
  #allocation1 [shape = 'u32[144,128]{1,0:T(1,128)}', space=vmem, size = 0x12000, scoped, tag = 'internal scratch']
  %s0 = inlined_call_operand.vmem [shape: f32[8,128], index: 0, kind: input, shape index: {}]
  %s1 = inlined_call_operand.hbm [shape: bf16[128,128], index: 1, kind: input, shape index: {}]
  %s2 = inlined_call_operand.hbm [shape: bf16[128,128], index: 2, kind: input, shape index: {}]
  %s3 = inlined_call_operand.hbm [shape: bf16[128,128], index: 3, kind: input, shape index: {}]
  %s4 = inlined_call_operand.vmem [shape: bf16[128,128], index: 4, kind: input, shape index: {}]
  %s5 = inlined_call_operand.vmem [shape: f32[1,128], index: 5, kind: input, shape index: {}, may-alias: {5,6,7,8,11,12}]
  %s6 = inlined_call_operand.vmem [shape: f32[1,128], index: 6, kind: input, shape index: {}, may-alias: {5,6,7,8,11,12}]
  %s7 = inlined_call_operand.vmem [shape: f32[1,128], index: 7, kind: input, shape index: {}, may-alias: {5,6,7,8,11,12}]
  %s8 = inlined_call_operand.vmem [shape: f32[1,128], index: 8, kind: input, shape index: {}, may-alias: {5,6,7,8,11,12}]
  %s9 = inlined_call_operand.vmem [shape: f32[1,128], index: 9, kind: input, shape index: {}, may-alias: {9,10}]
  %s10 = inlined_call_operand.vmem [shape: f32[1,128], index: 10, kind: input, shape index: {}, may-alias: {9,10}]
  %s11 = inlined_call_operand.vmem [shape: f32[1,128], index: 11, kind: input, shape index: {}, may-alias: {5,6,7,8,11,12}]
  %s12 = inlined_call_operand.vmem [shape: f32[1,128], index: 12, kind: input, shape index: {}, may-alias: {5,6,7,8,11,12}]
  %s13 = inlined_call_operand.hbm [shape: f32[8,128], index: 13, kind: output, shape index: {}]
  %s14 = sld [smem:[#allocation0]]
  $region74: #{_lambda_.1} parent=0
    _
  %s16 = ssub.s32 1, %s14
  %s17 = scalar_select 0, %s16, %s14
  $region1: #{_lambda_.1} parent=0
    #allocation2 [shape = 'u8[32768]{0}', space=vmem, size = 0x8000, scoped, tag = 'input window, operand 1, single buffered']
    #allocation3 [shape = 's32[1]{0}', space=sflag, size = 0x4, scoped, tag = 'scoped memory for _lambda_.1']
    #allocation4 [shape = 's32[1]{0}', space=sflag, size = 0x4, scoped, tag = 'scoped memory for _lambda_.1']
    #allocation5 [shape = 'u8[32768]{0}', space=vmem, size = 0x8000, scoped, tag = 'input window, operand 2, single buffered']
    #allocation6 [shape = 's32[1]{0}', space=sflag, size = 0x4, scoped, tag = 'scoped memory for _lambda_.1']
    #allocation7 [shape = 'u8[32768]{0}', space=vmem, size = 0x8000, scoped, tag = 'input window, operand 3, single buffered']
    #allocation8 [shape = 'u8[4096]{0}', space=vmem, size = 0x1000, scoped, tag = 'output window, operand 0, single buffered']
    %18 = vsyncpa [#allocation3], 0
    %19 = vsyncpa [#allocation6], 0
    %20 = vsyncpa [#allocation4], 0
    // Predicated region
    $region2: #{_lambda_.1} parent=1 // pred_check
      _
    $region3: #{_lambda_.1} parent=1 // pred_check_branch
      %22 = sbr.rel (0) target = $region5
    $region4: #{_lambda_.1} parent=1 // pred_region
      _
    $region5: #{_lambda_.1} parent=1 // pred_fallthru
      _
    // Predicated region
    $region6: #{_lambda_.1} parent=1 // pred_check
      _
    $region7: #{_lambda_.1} parent=1 // pred_check_branch
      %24 = sbr.rel (0) target = $region9
    $region8: #{_lambda_.1} parent=1 // pred_region
      %s26 = ssub.s32 1024, 1024
      %27 = vsyncadd [#allocation3], %s26
      %s28 = sshll.u32 [#allocation2], 4
      %s29 = int_to_ptr.vmem [resolvable:$true] %s28
      %34 = dma.hbm_to_vmem [thread:$0]  %s1, 1024, %s29, [#allocation3], 64, 64, 4
    $region9: #{_lambda_.1} parent=1 // pred_fallthru
      _
    // Predicated region
    $region10: #{_lambda_.1} parent=1 // pred_check
      _
    $region11: #{_lambda_.1} parent=1 // pred_check_branch
      %36 = sbr.rel (0) target = $region13
    $region12: #{_lambda_.1} parent=1 // pred_region
      %s38 = ssub.s32 1024, 1024
      %39 = vsyncadd [#allocation6], %s38
      %s40 = sshll.u32 [#allocation5], 4
      %s41 = int_to_ptr.vmem [resolvable:$true] %s40
      %46 = dma.hbm_to_vmem [thread:$0]  %s2, 1024, %s41, [#allocation6], 64, 64, 4
    $region13: #{_lambda_.1} parent=1 // pred_fallthru
      _
    // Predicated region
    $region14: #{_lambda_.1} parent=1 // pred_check
      _
    $region15: #{_lambda_.1} parent=1 // pred_check_branch
      %48 = sbr.rel (0) target = $region17
    $region16: #{_lambda_.1} parent=1 // pred_region
      %s50 = ssub.s32 1024, 1024
      %51 = vsyncadd [#allocation6], %s50
      %s52 = sshll.u32 [#allocation7], 4
      %s53 = int_to_ptr.vmem [resolvable:$true] %s52
      %58 = dma.hbm_to_vmem [thread:$0]  %s3, 1024, %s53, [#allocation6], 64, 64, 4
    $region17: #{_lambda_.1} parent=1 // pred_fallthru
      _
    // Predicated region
    $region18: #{_lambda_.1} parent=1 // pred_check
      _
    $region19: #{_lambda_.1} parent=1 // pred_check_branch
      %60 = sbr.rel (0) target = $region21
    $region20: #{_lambda_.1} parent=1 // pred_region
      _
    $region21: #{_lambda_.1} parent=1 // pred_fallthru
      _
    // Predicated region
    $region22: #{_lambda_.1} parent=1 // pred_check
      _
    $region23: #{_lambda_.1} parent=1 // pred_check_branch
      %62 = sbr.rel (0) target = $region25
    $region24: #{_lambda_.1} parent=1 // pred_region
      _
    $region25: #{_lambda_.1} parent=1 // pred_fallthru
      _
    // Predicated region
    $region26: #{_lambda_.1} parent=1 // pred_check
      _
    $region27: #{_lambda_.1} parent=1 // pred_check_branch
      %64 = sbr.rel (0) target = $region29
    $region28: #{_lambda_.1} parent=1 // pred_region
      _
    $region29: #{_lambda_.1} parent=1 // pred_fallthru
      _
    // Predicated region
    $region30: #{_lambda_.1} parent=1 // pred_check
      _
    $region31: #{_lambda_.1} parent=1 // pred_check_branch
      %66 = sbr.rel (0) target = $region33
    $region32: #{_lambda_.1} parent=1 // pred_region
      _
    $region33: #{_lambda_.1} parent=1 // pred_fallthru
      _
    // Predicated region
    $region34: #{_lambda_.1} parent=1 // pred_check
      _
    $region35: #{_lambda_.1} parent=1 // pred_check_branch
      %68 = sbr.rel (0) target = $region37
    $region36: #{_lambda_.1} parent=1 // pred_region
      _
    $region37: #{_lambda_.1} parent=1 // pred_fallthru
      _
    // Predicated region
    $region38: #{_lambda_.1} parent=1 // pred_check
      _
    $region39: #{_lambda_.1} parent=1 // pred_check_branch
      %70 = sbr.rel (0) target = $region41
    $region40: #{_lambda_.1} parent=1 // pred_region
      _
    $region41: #{_lambda_.1} parent=1 // pred_fallthru
      _
    // Predicated region
    $region42: #{_lambda_.1} parent=1 // pred_check
      _
    $region43: #{_lambda_.1} parent=1 // pred_check_branch
      %72 = sbr.rel (0) target = $region45
    $region44: #{_lambda_.1} parent=1 // pred_region
      _
    $region45: #{_lambda_.1} parent=1 // pred_fallthru
      _
    // Predicated region
    $region46: #{_lambda_.1} parent=1 // pred_check
      _
    $region47: #{_lambda_.1} parent=1 // pred_check_branch
      %74 = sbr.rel (0) target = $region49
    $region48: #{_lambda_.1} parent=1 // pred_region
      _
    $region49: #{_lambda_.1} parent=1 // pred_fallthru
      _
    // Predicated region
    $region50: #{_lambda_.1} parent=1 // pred_check
      _
    $region51: #{_lambda_.1} parent=1 // pred_check_branch
      %76 = sbr.rel (0) target = $region53
    $region52: #{_lambda_.1} parent=1 // pred_region
      _
    $region53: #{_lambda_.1} parent=1 // pred_fallthru
      _
    // Predicated region
    $region54: #{_lambda_.1} parent=1 // pred_check
      _
    $region55: #{_lambda_.1} parent=1 // pred_check_branch
      %78 = sbr.rel (0) target = $region57
    $region56: #{_lambda_.1} parent=1 // pred_region
      %79 = dma.done [#allocation3], 1024
    $region57: #{_lambda_.1} parent=1 // pred_fallthru
      _
    // Predicated region
    $region58: #{_lambda_.1} parent=1 // pred_check
      _
    $region59: #{_lambda_.1} parent=1 // pred_check_branch
      %81 = sbr.rel (0) target = $region61
    $region60: #{_lambda_.1} parent=1 // pred_region
      %82 = dma.done [#allocation6], 1024
    $region61: #{_lambda_.1} parent=1 // pred_fallthru
      _
    // Predicated region
    $region62: #{_lambda_.1} parent=1 // pred_check
      _
    $region63: #{_lambda_.1} parent=1 // pred_check_branch
      %84 = sbr.rel (0) target = $region65
    $region64: #{_lambda_.1} parent=1 // pred_region
      %85 = dma.done [#allocation6], 1024
    $region65: #{_lambda_.1} parent=1 // pred_fallthru
      _
    %v87 = vld [vmem:[%s0] sm:$0xff]
    %v88 = vpack.c.bf16 %v87, %v87
    %v89 = vld [vmem:[#allocation2] sm:$0xf]
    %v90 = vld [vmem:[#allocation2 + $0x4] sm:$0xf]
    %v91 = vld [vmem:[#allocation2 + $0x8] sm:$0xf]
    %v92 = vld [vmem:[#allocation2 + $0xc] sm:$0xf]
    %v93 = vld [vmem:[#allocation2 + $0x10] sm:$0xf]
    %v94 = vld [vmem:[#allocation2 + $0x14] sm:$0xf]
    %v95 = vld [vmem:[#allocation2 + $0x18] sm:$0xf]
    %v96 = vld [vmem:[#allocation2 + $0x1c] sm:$0xf]
    %v97 = vld [vmem:[#allocation2 + $0x20] sm:$0xf]
    %v98 = vld [vmem:[#allocation2 + $0x24] sm:$0xf]
    %v99 = vld [vmem:[#allocation2 + $0x28] sm:$0xf]
    %v100 = vld [vmem:[#allocation2 + $0x2c] sm:$0xf]
    %v101 = vld [vmem:[#allocation2 + $0x30] sm:$0xf]
    %v102 = vld [vmem:[#allocation2 + $0x34] sm:$0xf]
    %v103 = vld [vmem:[#allocation2 + $0x38] sm:$0xf]
    %v104 = vld [vmem:[#allocation2 + $0x3c] sm:$0xf]
    %v105 = vld [vmem:[%s5] sm:$0x1]
    %v107 = vlaneseq
    %v108 = vshrl.u32 %v107, 7
    %v109 = vsub.s32 0, %v108
    %v110 = vrot.slane %v105, %v109
    %v128 = vunpack.c.l.b16 %v89
    %v129 = vunpack.c.l.b16 %v90
    %v130 = vunpack.c.l.b16 %v91
    %v131 = vunpack.c.l.b16 %v92
    %v132 = vunpack.c.l.b16 %v93
    %v133 = vunpack.c.l.b16 %v94
    %v134 = vunpack.c.l.b16 %v95
    %v135 = vunpack.c.l.b16 %v96
    %v136 = vunpack.c.l.b16 %v97
    %v137 = vunpack.c.l.b16 %v98
    %v138 = vunpack.c.l.b16 %v99
    %v139 = vunpack.c.l.b16 %v100
    %v140 = vunpack.c.l.b16 %v101
    %v141 = vunpack.c.l.b16 %v102
    %v142 = vunpack.c.l.b16 %v103
    %v143 = vunpack.c.l.b16 %v104
    %v144 = vpack.c.b16 %v129, %v128
    %v145 = vpack.c.b16 %v131, %v130
    %v146 = vpack.c.b16 %v133, %v132
    %v147 = vpack.c.b16 %v135, %v134
    %v148 = vpack.c.b16 %v137, %v136
    %v149 = vpack.c.b16 %v139, %v138
    %v150 = vpack.c.b16 %v141, %v140
    %v151 = vpack.c.b16 %v143, %v142
    %160 = vmatprep.subr.bf16.mxu0 0
    %161 = vmatpush1.bf16.msra.mxu0 %v144
    %162 = vmatprep.subr.bf16.mxu0 0
    %163 = vmatpush1.bf16.msra.mxu0 %v145
    %164 = vmatprep.subr.bf16.mxu0 0
    %165 = vmatpush1.bf16.msra.mxu0 %v146
    %166 = vmatprep.subr.bf16.mxu0 0
    %167 = vmatpush1.bf16.msra.mxu0 %v147
    %168 = vmatprep.subr.bf16.mxu0 0
    %169 = vmatpush1.bf16.msra.mxu0 %v148
    %170 = vmatprep.subr.bf16.mxu0 0
    %171 = vmatpush1.bf16.msra.mxu0 %v149
    %172 = vmatprep.subr.bf16.mxu0 0
    %173 = vmatpush1.bf16.msra.mxu0 %v150
    %174 = vmatprep.subr.bf16.mxu0 0
    %175 = vmatpush1.bf16.msra.mxu0 %v151
    %176 = vmatprep.subr.bf16.mxu0 0
    %177 = vmatpush1.bf16.msra.mxu0 0
    %178 = vmatprep.subr.bf16.mxu0 0
    %179 = vmatpush1.bf16.msra.mxu0 0
    %180 = vmatprep.subr.bf16.mxu0 0
    %181 = vmatpush1.bf16.msra.mxu0 0
    %182 = vmatprep.subr.bf16.mxu0 0
    %183 = vmatpush1.bf16.msra.mxu0 0
    %184 = vmatprep.subr.bf16.mxu0 0
    %185 = vmatpush1.bf16.msra.mxu0 0
    %186 = vmatprep.subr.bf16.mxu0 0
    %187 = vmatpush1.bf16.msra.mxu0 0
    %188 = vmatprep.subr.bf16.mxu0 0
    %189 = vmatpush1.bf16.msra.mxu0 0
    %190 = vmatprep.subr.bf16.mxu0 0
    %191 = vmatpush1.bf16.msra.mxu0 0
    %192 = vmatprep.mubr.bf16.mxu0 0
    %193 = vmatmul.mubr.bf16.gmra.mrb[0].mxu0 %v88
    %v194 = vpop.f32.mrb[0].mxu0
    %v195 = vadd.f32 %v110, %v194
    %v196 = vpop.f32.mrb[0].mxu0
    %v197 = vpop.f32.mrb[0].mxu0
    %v198 = vpop.f32.mrb[0].mxu0
    %199 = vdwg.mxu0
    %v200 = vtanh.pop %v195
    %201 = vadd.xlane.f32.xlu0 %v200
    %v202 = vpop.xlane.xlu0 %201
    %v203 = vmul.f32 %v202, 0.03125
    %v204 = vmul.f32 %v200, %v200
    %205 = vadd.xlane.f32.xlu0 %v204
    %v206 = vpop.xlane.xlu0 %205
    %v207 = vmul.f32 %v206, 0.03125
    %v208 = vmul.f32 %v203, %v203
    %v209 = vsub.f32 %v207, %v208
    %v210 = vadd.f32 %v209, 1e-05
    %v211 = vrsqrt.pop %v210
    %v212 = vsub.f32 %v200, %v203
    %v213 = vld [vmem:[%s9] sm:$0x1]
    %v215 = vlaneseq
    %v216 = vshrl.u32 %v215, 7
    %v217 = vsub.s32 0, %v216
    %v218 = vrot.slane %v213, %v217
    %v220 = vmul.f32 %v211, %v218
    %v221 = vmul.f32 %v212, %v220
    %v222 = vld [vmem:[%s11] sm:$0x1]
    %v224 = vlaneseq
    %v225 = vshrl.u32 %v224, 7
    %v226 = vsub.s32 0, %v225
    %v227 = vrot.slane %v222, %v226
    %v229 = vadd.f32 %v221, %v227
    %v230 = vpack.c.bf16 %v229, %v229
    %v231 = vld [vmem:[#allocation5] sm:$0xf]
    %v232 = vld [vmem:[#allocation5 + $0x4] sm:$0xf]
    %v233 = vld [vmem:[#allocation5 + $0x8] sm:$0xf]
    %v234 = vld [vmem:[#allocation5 + $0xc] sm:$0xf]
    %v235 = vld [vmem:[#allocation5 + $0x10] sm:$0xf]
    %v236 = vld [vmem:[#allocation5 + $0x14] sm:$0xf]
    %v237 = vld [vmem:[#allocation5 + $0x18] sm:$0xf]
    %v238 = vld [vmem:[#allocation5 + $0x1c] sm:$0xf]
    %v239 = vld [vmem:[#allocation5 + $0x20] sm:$0xf]
    %v240 = vld [vmem:[#allocation5 + $0x24] sm:$0xf]
    %v241 = vld [vmem:[#allocation5 + $0x28] sm:$0xf]
    %v242 = vld [vmem:[#allocation5 + $0x2c] sm:$0xf]
    %v243 = vld [vmem:[#allocation5 + $0x30] sm:$0xf]
    %v244 = vld [vmem:[#allocation5 + $0x34] sm:$0xf]
    %v245 = vld [vmem:[#allocation5 + $0x38] sm:$0xf]
    %v246 = vld [vmem:[#allocation5 + $0x3c] sm:$0xf]
    %v247 = vld [vmem:[%s6] sm:$0x1]
    %v249 = vlaneseq
    %v250 = vshrl.u32 %v249, 7
    %v251 = vsub.s32 0, %v250
    %v252 = vrot.slane %v247, %v251
    %v270 = vunpack.c.l.b16 %v231
    %v271 = vunpack.c.l.b16 %v232
    %v272 = vunpack.c.l.b16 %v233
    %v273 = vunpack.c.l.b16 %v234
    %v274 = vunpack.c.l.b16 %v235
    %v275 = vunpack.c.l.b16 %v236
    %v276 = vunpack.c.l.b16 %v237
    %v277 = vunpack.c.l.b16 %v238
    %v278 = vunpack.c.l.b16 %v239
    %v279 = vunpack.c.l.b16 %v240
    %v280 = vunpack.c.l.b16 %v241
    %v281 = vunpack.c.l.b16 %v242
    %v282 = vunpack.c.l.b16 %v243
    %v283 = vunpack.c.l.b16 %v244
    %v284 = vunpack.c.l.b16 %v245
    %v285 = vunpack.c.l.b16 %v246
    %v286 = vpack.c.b16 %v271, %v270
    %v287 = vpack.c.b16 %v273, %v272
    %v288 = vpack.c.b16 %v275, %v274
    %v289 = vpack.c.b16 %v277, %v276
    %v290 = vpack.c.b16 %v279, %v278
    %v291 = vpack.c.b16 %v281, %v280
    %v292 = vpack.c.b16 %v283, %v282
    %v293 = vpack.c.b16 %v285, %v284
    %302 = vmatprep.subr.bf16.mxu0 0
    %303 = vmatpush1.bf16.msra.mxu0 %v286
    %304 = vmatprep.subr.bf16.mxu0 0
    %305 = vmatpush1.bf16.msra.mxu0 %v287
    %306 = vmatprep.subr.bf16.mxu0 0
    %307 = vmatpush1.bf16.msra.mxu0 %v288
    %308 = vmatprep.subr.bf16.mxu0 0
    %309 = vmatpush1.bf16.msra.mxu0 %v289
    %310 = vmatprep.subr.bf16.mxu0 0
    %311 = vmatpush1.bf16.msra.mxu0 %v290
    %312 = vmatprep.subr.bf16.mxu0 0
    %313 = vmatpush1.bf16.msra.mxu0 %v291
    %314 = vmatprep.subr.bf16.mxu0 0
    %315 = vmatpush1.bf16.msra.mxu0 %v292
    %316 = vmatprep.subr.bf16.mxu0 0
    %317 = vmatpush1.bf16.msra.mxu0 %v293
    %318 = vmatprep.subr.bf16.mxu0 0
    %319 = vmatpush1.bf16.msra.mxu0 0
    %320 = vmatprep.subr.bf16.mxu0 0
    %321 = vmatpush1.bf16.msra.mxu0 0
    %322 = vmatprep.subr.bf16.mxu0 0
    %323 = vmatpush1.bf16.msra.mxu0 0
    %324 = vmatprep.subr.bf16.mxu0 0
    %325 = vmatpush1.bf16.msra.mxu0 0
    %326 = vmatprep.subr.bf16.mxu0 0
    %327 = vmatpush1.bf16.msra.mxu0 0
    %328 = vmatprep.subr.bf16.mxu0 0
    %329 = vmatpush1.bf16.msra.mxu0 0
    %330 = vmatprep.subr.bf16.mxu0 0
    %331 = vmatpush1.bf16.msra.mxu0 0
    %332 = vmatprep.subr.bf16.mxu0 0
    %333 = vmatpush1.bf16.msra.mxu0 0
    %334 = vmatprep.mubr.bf16.mxu0 0
    %335 = vmatmul.mubr.bf16.gmra.mrb[0].mxu0 %v230
    %v336 = vpop.f32.mrb[0].mxu0
    %v337 = vadd.f32 %v252, %v336
    %v338 = vpop.f32.mrb[0].mxu0
    %v339 = vpop.f32.mrb[0].mxu0
    %v340 = vpop.f32.mrb[0].mxu0
    %341 = vdwg.mxu0
    %v342 = vtanh.pop %v337
    %343 = vadd.xlane.f32.xlu0 %v342
    %v344 = vpop.xlane.xlu0 %343
    %v345 = vmul.f32 %v344, 0.03125
    %v346 = vmul.f32 %v342, %v342
    %347 = vadd.xlane.f32.xlu0 %v346
    %v348 = vpop.xlane.xlu0 %347
    %v349 = vmul.f32 %v348, 0.03125
    %v350 = vmul.f32 %v345, %v345
    %v351 = vsub.f32 %v349, %v350
    %v352 = vadd.f32 %v351, 1e-05
    %v353 = vrsqrt.pop %v352
    %v354 = vsub.f32 %v342, %v345
    %v355 = vld [vmem:[%s10] sm:$0x1]
    %v357 = vlaneseq
    %v358 = vshrl.u32 %v357, 7
    %v359 = vsub.s32 0, %v358
    %v360 = vrot.slane %v355, %v359
    %v362 = vmul.f32 %v353, %v360
    %v363 = vmul.f32 %v354, %v362
    %v364 = vld [vmem:[%s12] sm:$0x1]
    %v366 = vlaneseq
    %v367 = vshrl.u32 %v366, 7
    %v368 = vsub.s32 0, %v367
    %v369 = vrot.slane %v364, %v368
    %v371 = vadd.f32 %v363, %v369
    %v372 = vpack.c.bf16 %v371, %v371
    %v373 = vld [vmem:[#allocation7] sm:$0xf]
    %v374 = vld [vmem:[#allocation7 + $0x4] sm:$0xf]
    %v375 = vld [vmem:[#allocation7 + $0x8] sm:$0xf]
    %v376 = vld [vmem:[#allocation7 + $0xc] sm:$0xf]
    %v377 = vld [vmem:[#allocation7 + $0x10] sm:$0xf]
    %v378 = vld [vmem:[#allocation7 + $0x14] sm:$0xf]
    %v379 = vld [vmem:[#allocation7 + $0x18] sm:$0xf]
    %v380 = vld [vmem:[#allocation7 + $0x1c] sm:$0xf]
    %v381 = vld [vmem:[#allocation7 + $0x20] sm:$0xf]
    %v382 = vld [vmem:[#allocation7 + $0x24] sm:$0xf]
    %v383 = vld [vmem:[#allocation7 + $0x28] sm:$0xf]
    %v384 = vld [vmem:[#allocation7 + $0x2c] sm:$0xf]
    %v385 = vld [vmem:[#allocation7 + $0x30] sm:$0xf]
    %v386 = vld [vmem:[#allocation7 + $0x34] sm:$0xf]
    %v387 = vld [vmem:[#allocation7 + $0x38] sm:$0xf]
    %v388 = vld [vmem:[#allocation7 + $0x3c] sm:$0xf]
    %v389 = vld [vmem:[%s7] sm:$0x1]
    %v391 = vlaneseq
    %v392 = vshrl.u32 %v391, 7
    %v393 = vsub.s32 0, %v392
    %v394 = vrot.slane %v389, %v393
    %v412 = vunpack.c.l.b16 %v373
    %v413 = vunpack.c.l.b16 %v374
    %v414 = vunpack.c.l.b16 %v375
    %v415 = vunpack.c.l.b16 %v376
    %v416 = vunpack.c.l.b16 %v377
    %v417 = vunpack.c.l.b16 %v378
    %v418 = vunpack.c.l.b16 %v379
    %v419 = vunpack.c.l.b16 %v380
    %v420 = vunpack.c.l.b16 %v381
    %v421 = vunpack.c.l.b16 %v382
    %v422 = vunpack.c.l.b16 %v383
    %v423 = vunpack.c.l.b16 %v384
    %v424 = vunpack.c.l.b16 %v385
    %v425 = vunpack.c.l.b16 %v386
    %v426 = vunpack.c.l.b16 %v387
    %v427 = vunpack.c.l.b16 %v388
    %v428 = vpack.c.b16 %v413, %v412
    %v429 = vpack.c.b16 %v415, %v414
    %v430 = vpack.c.b16 %v417, %v416
    %v431 = vpack.c.b16 %v419, %v418
    %v432 = vpack.c.b16 %v421, %v420
    %v433 = vpack.c.b16 %v423, %v422
    %v434 = vpack.c.b16 %v425, %v424
    %v435 = vpack.c.b16 %v427, %v426
    %444 = vmatprep.subr.bf16.mxu0 0
    %445 = vmatpush1.bf16.msra.mxu0 %v428
    %446 = vmatprep.subr.bf16.mxu0 0
    %447 = vmatpush1.bf16.msra.mxu0 %v429
    %448 = vmatprep.subr.bf16.mxu0 0
    %449 = vmatpush1.bf16.msra.mxu0 %v430
    %450 = vmatprep.subr.bf16.mxu0 0
    %451 = vmatpush1.bf16.msra.mxu0 %v431
    %452 = vmatprep.subr.bf16.mxu0 0
    %453 = vmatpush1.bf16.msra.mxu0 %v432
    %454 = vmatprep.subr.bf16.mxu0 0
    %455 = vmatpush1.bf16.msra.mxu0 %v433
    %456 = vmatprep.subr.bf16.mxu0 0
    %457 = vmatpush1.bf16.msra.mxu0 %v434
    %458 = vmatprep.subr.bf16.mxu0 0
    %459 = vmatpush1.bf16.msra.mxu0 %v435
    %460 = vmatprep.subr.bf16.mxu0 0
    %461 = vmatpush1.bf16.msra.mxu0 0
    %462 = vmatprep.subr.bf16.mxu0 0
    %463 = vmatpush1.bf16.msra.mxu0 0
    %464 = vmatprep.subr.bf16.mxu0 0
    %465 = vmatpush1.bf16.msra.mxu0 0
    %466 = vmatprep.subr.bf16.mxu0 0
    %467 = vmatpush1.bf16.msra.mxu0 0
    %468 = vmatprep.subr.bf16.mxu0 0
    %469 = vmatpush1.bf16.msra.mxu0 0
    %470 = vmatprep.subr.bf16.mxu0 0
    %471 = vmatpush1.bf16.msra.mxu0 0
    %472 = vmatprep.subr.bf16.mxu0 0
    %473 = vmatpush1.bf16.msra.mxu0 0
    %474 = vmatprep.subr.bf16.mxu0 0
    %475 = vmatpush1.bf16.msra.mxu0 0
    %476 = vmatprep.mubr.bf16.mxu0 0
    %477 = vmatmul.mubr.bf16.gmra.mrb[0].mxu0 %v372
    %v478 = vpop.f32.mrb[0].mxu0
    %v479 = vadd.f32 %v394, %v478
    %v480 = vpop.f32.mrb[0].mxu0
    %v481 = vpop.f32.mrb[0].mxu0
    %v482 = vpop.f32.mrb[0].mxu0
    %483 = vdwg.mxu0
    %v484 = vtanh.pop %v479
    %v485 = vpack.c.bf16 %v484, %v484
    %v486 = vld [vmem:[%s4] sm:$0xf]
    %v487 = vld [vmem:[%s4 + $0x4] sm:$0xf]
    %v488 = vld [vmem:[%s4 + $0x8] sm:$0xf]
    %v489 = vld [vmem:[%s4 + $0xc] sm:$0xf]
    %v490 = vld [vmem:[%s4 + $0x10] sm:$0xf]
    %v491 = vld [vmem:[%s4 + $0x14] sm:$0xf]
    %v492 = vld [vmem:[%s4 + $0x18] sm:$0xf]
    %v493 = vld [vmem:[%s4 + $0x1c] sm:$0xf]
    %v494 = vld [vmem:[%s4 + $0x20] sm:$0xf]
    %v495 = vld [vmem:[%s4 + $0x24] sm:$0xf]
    %v496 = vld [vmem:[%s4 + $0x28] sm:$0xf]
    %v497 = vld [vmem:[%s4 + $0x2c] sm:$0xf]
    %v498 = vld [vmem:[%s4 + $0x30] sm:$0xf]
    %v499 = vld [vmem:[%s4 + $0x34] sm:$0xf]
    %v500 = vld [vmem:[%s4 + $0x38] sm:$0xf]
    %v501 = vld [vmem:[%s4 + $0x3c] sm:$0xf]
    %v502 = vld [vmem:[%s8] sm:$0x1]
    %v504 = vlaneseq
    %v505 = vshrl.u32 %v504, 7
    %v506 = vsub.s32 0, %v505
    %v507 = vrot.slane %v502, %v506
    %v525 = vunpack.c.l.b16 %v486
    %v526 = vunpack.c.l.b16 %v487
    %v527 = vunpack.c.l.b16 %v488
    %v528 = vunpack.c.l.b16 %v489
    %v529 = vunpack.c.l.b16 %v490
    %v530 = vunpack.c.l.b16 %v491
    %v531 = vunpack.c.l.b16 %v492
    %v532 = vunpack.c.l.b16 %v493
    %v533 = vunpack.c.l.b16 %v494
    %v534 = vunpack.c.l.b16 %v495
    %v535 = vunpack.c.l.b16 %v496
    %v536 = vunpack.c.l.b16 %v497
    %v537 = vunpack.c.l.b16 %v498
    %v538 = vunpack.c.l.b16 %v499
    %v539 = vunpack.c.l.b16 %v500
    %v540 = vunpack.c.l.b16 %v501
    %v541 = vpack.c.b16 %v526, %v525
    %v542 = vpack.c.b16 %v528, %v527
    %v543 = vpack.c.b16 %v530, %v529
    %v544 = vpack.c.b16 %v532, %v531
    %v545 = vpack.c.b16 %v534, %v533
    %v546 = vpack.c.b16 %v536, %v535
    %v547 = vpack.c.b16 %v538, %v537
    %v548 = vpack.c.b16 %v540, %v539
    %557 = vmatprep.subr.bf16.mxu0 0
    %558 = vmatpush1.bf16.msra.mxu0 %v541
    %559 = vmatprep.subr.bf16.mxu0 0
    %560 = vmatpush1.bf16.msra.mxu0 %v542
    %561 = vmatprep.subr.bf16.mxu0 0
    %562 = vmatpush1.bf16.msra.mxu0 %v543
    %563 = vmatprep.subr.bf16.mxu0 0
    %564 = vmatpush1.bf16.msra.mxu0 %v544
    %565 = vmatprep.subr.bf16.mxu0 0
    %566 = vmatpush1.bf16.msra.mxu0 %v545
    %567 = vmatprep.subr.bf16.mxu0 0
    %568 = vmatpush1.bf16.msra.mxu0 %v546
    %569 = vmatprep.subr.bf16.mxu0 0
    %570 = vmatpush1.bf16.msra.mxu0 %v547
    %571 = vmatprep.subr.bf16.mxu0 0
    %572 = vmatpush1.bf16.msra.mxu0 %v548
    %573 = vmatprep.subr.bf16.mxu0 0
    %574 = vmatpush1.bf16.msra.mxu0 0
    %575 = vmatprep.subr.bf16.mxu0 0
    %576 = vmatpush1.bf16.msra.mxu0 0
    %577 = vmatprep.subr.bf16.mxu0 0
    %578 = vmatpush1.bf16.msra.mxu0 0
    %579 = vmatprep.subr.bf16.mxu0 0
    %580 = vmatpush1.bf16.msra.mxu0 0
    %581 = vmatprep.subr.bf16.mxu0 0
    %582 = vmatpush1.bf16.msra.mxu0 0
    %583 = vmatprep.subr.bf16.mxu0 0
    %584 = vmatpush1.bf16.msra.mxu0 0
    %585 = vmatprep.subr.bf16.mxu0 0
    %586 = vmatpush1.bf16.msra.mxu0 0
    %587 = vmatprep.subr.bf16.mxu0 0
    %588 = vmatpush1.bf16.msra.mxu0 0
    %589 = vmatprep.mubr.bf16.mxu0 0
    %590 = vmatmul.mubr.bf16.gmra.mrb[0].mxu0 %v485
    %v591 = vpop.f32.mrb[0].mxu0
    %v592 = vadd.f32 %v507, %v591
    %v593 = vpop.f32.mrb[0].mxu0
    %v594 = vpop.f32.mrb[0].mxu0
    %v595 = vpop.f32.mrb[0].mxu0
    %596 = vdwg.mxu0
    %597 = vst [vmem:[#allocation8] sm:$0xff] %v592
    // Predicated region
    $region66: #{_lambda_.1} parent=1 // pred_check
      _
    $region67: #{_lambda_.1} parent=1 // pred_check_branch
      %599 = sbr.rel (0) target = $region69
    $region68: #{_lambda_.1} parent=1 // pred_region
      %s601 = ssub.s32 128, 128
      %602 = vsyncadd [#allocation4], %s601
      %s604 = sshll.u32 [#allocation8], 4
      %s605 = int_to_ptr.vmem [resolvable:$true] %s604
      %607 = dma.vmem_to_hbm [thread:$0]  %s605, 128, %s13, [#allocation4]
    $region69: #{_lambda_.1} parent=1 // pred_fallthru
      _
    // Predicated region
    $region70: #{_lambda_.1} parent=1 // pred_check
      _
    $region71: #{_lambda_.1} parent=1 // pred_check_branch
      %609 = sbr.rel (0) target = $region73
    $region72: #{_lambda_.1} parent=1 // pred_region
      %610 = dma.done [#allocation4], 128
    $region73: #{_lambda_.1} parent=1 // pred_fallthru
      _
    %611 = vsyncpa [#allocation3], 1
    %612 = vsyncpa [#allocation6], 1
    %613 = vsyncpa [#allocation4], 1

</llo_original>
